<compile_context>
chip_gen: v7x
topology: tpu7x:2x2x1
jax: 0.10.0
libtpu: 0.0.40
codegen_flags: <defaults>
</compile_context>

<pallas_src>
import functools
import math

import jax
import jax.numpy as jnp
from jax.experimental import pallas as pl
from jax.experimental.pallas import tpu as pltpu


def _add_pe_kernel(x_ref, pe_ref, o_ref):
    # x_ref / o_ref: (Bb, TF) lane-dense tile; pe_ref: (1, TF) -> broadcast add.
    o_ref[...] = x_ref[...] + pe_ref[...]


def _sinusoidal_pe(S: int, D: int) -> jax.Array:
    """Standard sinusoidal PE table (S, D) in float32."""
    pos = jnp.arange(S, dtype=jnp.float32)[:, None]              # (S, 1)
    i = jnp.arange(D)[None, :]                                    # (1, D)
    half = (i // 2).astype(jnp.float32)
    angle = pos * jnp.exp(-(2.0 * half / float(D)) * math.log(10000.0))
    return jnp.where(i % 2 == 0, jnp.sin(angle), jnp.cos(angle))


@functools.lru_cache(maxsize=None)
def _pe_table(S: int, D: int, dtype_name: str) -> jax.Array:
    """Flattened (1, S*D) PE table, computed once per (S, D, dtype) and cached
    as a committed device array (no per-call sin/cos recompute)."""
    pe = _sinusoidal_pe(S, D).astype(jnp.dtype(dtype_name)).reshape(1, S * D)
    return jax.block_until_ready(jax.device_put(pe))


def _choose_tiles(B: int, F: int, itemsize: int,
                  target_bytes: int = 4 * 1024 * 1024):
    """Pick (batch_tile, lane_tile) for the flattened (B, F) view.

    Batch tile must be a multiple of 8 or the full batch; lane tile must be a
    multiple of 128 or the full flattened extent (legal full-dim blocks)."""
    bb = B if B <= 8 else 8
    if F <= 128:
        tf = F                                    # full extent: always legal
    else:
        lane_budget = max(128, (target_bytes // (bb * itemsize) // 128) * 128)
        if F % 128 == 0 and F <= lane_budget:
            tf = F
        else:
            tf = min(lane_budget, max(128, (F // 128) * 128))
    # Spend any leftover per-block budget on more batch rows (amortizes the
    # fixed per-step pipeline overhead when S*D is small).
    if bb < B:
        rows = target_bytes // max(1, tf * itemsize)
        if rows > bb:
            bb = B if rows >= B else max(bb, (rows // 8) * 8)
    return bb, tf


def positional_encoding(x: jax.Array) -> jax.Array:
    """x: (batch, seq_len, d_model) float array. Returns x + sinusoidal PE."""
    B, S, D = x.shape
    F = S * D
    itemsize = jnp.dtype(x.dtype).itemsize

    pe = _pe_table(S, D, jnp.dtype(x.dtype).name)    # (1, F), cached on device
    x2 = x.reshape(B, F)                             # lane-dense flattened view

    bb, tf = _choose_tiles(B, F, itemsize)
    n_f = pl.cdiv(F, tf)
    n_b = pl.cdiv(B, bb)

    # VMEM budget: double-buffered x + out blocks, double-buffered PE block,
    # plus margin for compiler-internal scratch.
    block_bytes = bb * tf * itemsize
    pe_bytes = tf * itemsize
    vmem_limit = int(min(48 * 1024 * 1024,
                         4 * block_bytes + 2 * pe_bytes + 8 * 1024 * 1024))

    # Bandwidth-bound: read x once, write out once, read PE once (its block
    # index is constant across the inner batch axis, so it is not re-DMA'd).
    cost = pl.CostEstimate(
        flops=B * F,
        transcendentals=0,
        bytes_accessed=(2 * B * F + F) * itemsize,
    )

    out2 = pl.pallas_call(
        _add_pe_kernel,
        out_shape=jax.ShapeDtypeStruct((B, F), x.dtype),
        grid_spec=pl.GridSpec(
            grid=(n_f, n_b),  # batch innermost -> PE tile stays VMEM-resident
            in_specs=[
                pl.BlockSpec((bb, tf), lambda f, b: (b, f)),
                pl.BlockSpec((1, tf), lambda f, b: (0, f)),
            ],
            out_specs=pl.BlockSpec((bb, tf), lambda f, b: (b, f)),
        ),
        compiler_params=pltpu.CompilerParams(
            dimension_semantics=("parallel", "parallel"),
            vmem_limit_bytes=vmem_limit,
        ),
        cost_estimate=cost,
    )(x2, pe)

    return out2.reshape(B, S, D)


def _reference(x: jax.Array) -> jax.Array:
    """Plain-JAX reference for correctness checking."""
    _, S, D = x.shape
    pe = _sinusoidal_pe(S, D).astype(x.dtype)
    return x + pe[None, :, :]


if __name__ == "__main__":
    key = jax.random.PRNGKey(0)

    # Primary small test shape (batch=2, seq=8, hidden=32), f32.
    B, S, D = 2, 8, 32
    x = jax.random.normal(key, (B, S, D), dtype=jnp.float32)
    out = jax.block_until_ready(positional_encoding(x))
    ref = _reference(x)
    assert out.shape == (B, S, D), out.shape
    assert jnp.allclose(out, ref, atol=1e-5, rtol=1e-5), "f32 mismatch vs reference"

    # Odd shape: exercises the full-extent (non-128-multiple) lane block path.
    x2 = jax.random.normal(jax.random.PRNGKey(1), (3, 17, 40), dtype=jnp.float32)
    out2 = jax.block_until_ready(positional_encoding(x2))
    assert jnp.allclose(out2, _reference(x2), atol=1e-5, rtol=1e-5), "odd-shape mismatch"

    # bf16 path: PE cast to bf16 in the wrapper, VPU add in bf16.
    x3 = jax.random.normal(jax.random.PRNGKey(2), (B, S, D), dtype=jnp.bfloat16)
    out3 = jax.block_until_ready(positional_encoding(x3))
    assert jnp.allclose(out3.astype(jnp.float32), _reference(x3).astype(jnp.float32),
                        atol=2e-2, rtol=2e-2), "bf16 mismatch vs reference"

    print("KERNEL_OK")
</pallas_src>

<mosaic_0001>
module attributes {stable_mosaic.version = 11 : i64} {
  func.func @_add_pe_kernel(%arg0: i32, %arg1: i32, %arg2: memref<2x256xf32, #tpu.memory_space<vmem>>, %arg3: memref<1x256xf32, #tpu.memory_space<vmem>>, %arg4: memref<2x256xf32, #tpu.memory_space<vmem>>) attributes {dimension_semantics = [#tpu.dimension_semantics<parallel>, #tpu.dimension_semantics<parallel>], iteration_bounds = array<i64: 1, 1>, scalar_prefetch = 0 : i64, scratch_operands = 0 : i64, tpu.core_type = #tpu.core_type<tc>, window_params = [{transform_indices = @transform_0, window_bounds = array<i64: 2, 256>}, {transform_indices = @transform_1, window_bounds = array<i64: 1, 256>}, {transform_indices = @transform_2, window_bounds = array<i64: 2, 256>}]} {
    %c0 = arith.constant 0 : index
    %c0_0 = arith.constant 0 : index
    %0 = vector.load %arg2[%c0, %c0_0] : memref<2x256xf32, #tpu.memory_space<vmem>>, vector<2x256xf32>
    %c0_1 = arith.constant 0 : index
    %c0_2 = arith.constant 0 : index
    %1 = vector.load %arg3[%c0_1, %c0_2] : memref<1x256xf32, #tpu.memory_space<vmem>>, vector<1x256xf32>
    %2 = vector.broadcast %1 : vector<1x256xf32> to vector<2x256xf32>
    %3 = arith.addf %0, %2 : vector<2x256xf32>
    %c0_3 = arith.constant 0 : index
    %c0_4 = arith.constant 0 : index
    %4 = vector.load %arg4[%c0_3, %c0_4] : memref<2x256xf32, #tpu.memory_space<vmem>>, vector<2x256xf32>
    tpu.vector_store %arg4[%c0_3, %c0_4], %3 {strides = array<i32>} : memref<2x256xf32, #tpu.memory_space<vmem>>, vector<2x256xf32>,
    return
  }
  func.func @transform_0(%arg0: i32, %arg1: i32) -> (i32, i32) {
    %c0_i32 = arith.constant 0 : i32
    return %arg1, %arg0 : i32, i32
  }
  func.func @transform_1(%arg0: i32, %arg1: i32) -> (i32, i32) {
    %c0_i32 = arith.constant 0 : i32
    %c0_i32_0 = arith.constant 0 : i32
    return %c0_i32, %arg0 : i32, i32
  }
  func.func @transform_2(%arg0: i32, %arg1: i32) -> (i32, i32) {
    %c0_i32 = arith.constant 0 : i32
    return %arg1, %arg0 : i32, i32
  }
}

</mosaic_0001>

<llo_original>
// kernel: tpu_custom_call.1
$region0: #{tpu_custom_call.1}
  #allocation0 [shape = 'u32[]', space=smem, size = 0x4, offset = 0x4, fixed_abs, tag = 'smem constant byte address 0x4 - core index']
  #allocation1 [shape = 'u32[144,128]{1,0:T(1,128)}', space=vmem, size = 0x12000, scoped, tag = 'internal scratch']
  %s0 = inlined_call_operand.hbm [shape: f32[2,256], index: 0, kind: input, shape index: {}]
  %s1 = inlined_call_operand.vmem [shape: f32[1,256], index: 1, kind: input, shape index: {}]
  %s2 = inlined_call_operand.hbm [shape: f32[2,256], index: 2, kind: output, shape index: {}]
  %s3 = sld [smem:[#allocation0]]
  $region22: #{tpu_custom_call.1} parent=0
    _
  %s5 = ssub.s32 1, %s3
  %s6 = scalar_select 0, %s5, %s3
  $region1: #{tpu_custom_call.1} parent=0
    #allocation2 [shape = 'u8[2048]{0}', space=vmem, size = 0x800, scoped, tag = 'input window, operand 0, single buffered']
    #allocation3 [shape = 's32[1]{0}', space=sflag, size = 0x4, scoped, tag = 'scoped memory for tpu_custom_call.1']
    #allocation4 [shape = 's32[1]{0}', space=sflag, size = 0x4, scoped, tag = 'scoped memory for tpu_custom_call.1']
    #allocation5 [shape = 'u8[2048]{0}', space=vmem, size = 0x800, scoped, tag = 'output window, operand 0, single buffered']
    %7 = vsyncpa [#allocation3], 0
    %8 = vsyncpa [#allocation4], 0
    // Predicated region
    $region2: #{tpu_custom_call.1} parent=1 // pred_check
      _
    $region3: #{tpu_custom_call.1} parent=1 // pred_check_branch
      %10 = sbr.rel (0) target = $region5
    $region4: #{tpu_custom_call.1} parent=1 // pred_region
      %s12 = ssub.s32 64, 64
      %13 = vsyncadd [#allocation3], %s12
      %s15 = sshll.u32 [#allocation2], 4
      %s16 = int_to_ptr.vmem [resolvable:$true] %s15
      %18 = dma.hbm_to_vmem [thread:$0]  %s0, 64, %s16, [#allocation3]
    $region5: #{tpu_custom_call.1} parent=1 // pred_fallthru
      _
    // Predicated region
    $region6: #{tpu_custom_call.1} parent=1 // pred_check
      _
    $region7: #{tpu_custom_call.1} parent=1 // pred_check_branch
      %20 = sbr.rel (0) target = $region9
    $region8: #{tpu_custom_call.1} parent=1 // pred_region
      _
    $region9: #{tpu_custom_call.1} parent=1 // pred_fallthru
      _
    // Predicated region
    $region10: #{tpu_custom_call.1} parent=1 // pred_check
      _
    $region11: #{tpu_custom_call.1} parent=1 // pred_check_branch
      %22 = sbr.rel (0) target = $region13
    $region12: #{tpu_custom_call.1} parent=1 // pred_region
      %23 = dma.done [#allocation3], 64
    $region13: #{tpu_custom_call.1} parent=1 // pred_fallthru
      _
    %v24 = vld [vmem:[#allocation2] sm:$0xf]
    %v25 = vld [vmem:[%s1] sm:$0x3]
    %v27 = vlaneseq
    %v28 = vshrl.u32 %v27, 7
    %v29 = vsub.s32 0, %v28
    %v30 = vrot.slane %v25, %v29
    %v31 = vlaneseq
    %v32 = vshrl.u32 %v31, 7
    %v33 = vsub.s32 1, %v32
    %v34 = vrot.slane %v25, %v33
    %v35 = vcombine.low %v30, %v34
    %v37 = vunpack.c.l.s4 1983009808
    %v38 = vunpack.c.0.s8 %v37
    %v39 = vlaneseq
    %v40 = vshrl.u32 %v39, 7
    %v41 = vsub.s32 %v38, %v40
    %v42 = vrot.slane %v35, %v41
    %v44 = vadd.f32 %v24, %v42
    %45 = vst [vmem:[#allocation5] sm:$0xf] %v44
    // Predicated region
    $region14: #{tpu_custom_call.1} parent=1 // pred_check
      _
    $region15: #{tpu_custom_call.1} parent=1 // pred_check_branch
      %47 = sbr.rel (0) target = $region17
    $region16: #{tpu_custom_call.1} parent=1 // pred_region
      %s49 = ssub.s32 64, 64
      %50 = vsyncadd [#allocation4], %s49
      %s52 = sshll.u32 [#allocation5], 4
      %s53 = int_to_ptr.vmem [resolvable:$true] %s52
      %55 = dma.vmem_to_hbm [thread:$0]  %s53, 64, %s2, [#allocation4]
    $region17: #{tpu_custom_call.1} parent=1 // pred_fallthru
      _
    // Predicated region
    $region18: #{tpu_custom_call.1} parent=1 // pred_check
      _
    $region19: #{tpu_custom_call.1} parent=1 // pred_check_branch
      %57 = sbr.rel (0) target = $region21
    $region20: #{tpu_custom_call.1} parent=1 // pred_region
      %58 = dma.done [#allocation4], 64
    $region21: #{tpu_custom_call.1} parent=1 // pred_fallthru
      _
    %59 = vsyncpa [#allocation3], 1
    %60 = vsyncpa [#allocation4], 1

</llo_original>
